<compile_context>
chip_gen: v5e
topology: v5e:2x2
jax: 0.10.0
libtpu: 0.0.40
codegen_flags: <defaults>
</compile_context>

<pallas_src>
import functools

import jax
import jax.numpy as jnp
from jax import lax
from jax.experimental import pallas as pl
from jax.experimental.pallas import tpu as pltpu

EPS = 1e-07


def _vmem_capacity_bytes(default=64 * 1024 * 1024):
    """Best-effort VMEM capacity query; conservative default if unavailable."""
    try:
        info = pltpu.get_tpu_info()
        cap = getattr(info, "vmem_capacity_bytes", None)
        if cap:
            return int(cap)
    except Exception:
        pass
    return default


def _log_softmax_and_softmax(x):
    """(log_softmax(x,-1), softmax(x,-1)) with one exp pass, per-row log/recip."""
    x = x - jnp.max(x, axis=-1, keepdims=True)
    ex = jnp.exp(x)                                   # EUP: 1 exp / element
    s = jnp.sum(ex, axis=-1, keepdims=True)           # XLU row reduction
    log_sm = x - jnp.log(s)                           # per-row log only
    sm = ex * pl.reciprocal(s, approx=False)          # per-row reciprocal only
    return log_sm, sm


def _js_div_kernel(p_ref, q_ref, out_ref, *, chunk_rows, n_chunks,
                   tile_rows, tiles_per_split, valid_rows, mask_tail):
    # Per-parallel-slot resident accumulator: init on the first step of the
    # sequential ("arbitrary") axis.
    @pl.when(pl.program_id(1) == 0)
    def _init():
        out_ref[...] = jnp.zeros_like(out_ref)

    tile_idx = pl.program_id(0) * tiles_per_split + pl.program_id(1)
    tile_row0 = tile_idx * tile_rows

    def chunk_sum(r0):
        ps = p_ref[pl.ds(r0, chunk_rows), :].astype(jnp.float32)
        qs = q_ref[pl.ds(r0, chunk_rows), :].astype(jnp.float32)
        log_p, p = _log_softmax_and_softmax(ps)
        log_q, q = _log_softmax_and_softmax(qs)
        m = jnp.maximum(0.5 * (p + q), EPS)            # clamp(min=eps)
        log_m = jnp.log(m)                             # EUP: 1 log / element
        # Both KL terms fused: m*(log m - log p) + m*(log m - log q)
        integrand = m * (2.0 * log_m - log_p - log_q)
        row_sum = jnp.sum(integrand, axis=-1, keepdims=True)        # (cr, 1)
        if mask_tail:
            rows = (tile_row0 + r0
                    + lax.broadcasted_iota(jnp.int32, (chunk_rows, 1), 0))
            row_sum = jnp.where(rows < valid_rows, row_sum, 0.0)
        return jnp.sum(row_sum, axis=0, keepdims=True)               # (1, 1)

    if n_chunks == 1:
        tile_sum = chunk_sum(0)
    else:
        def body(c, acc):
            r0 = pl.multiple_of(c * chunk_rows, chunk_rows)
            return acc + chunk_sum(r0)
        tile_sum = lax.fori_loop(0, n_chunks, body,
                                 jnp.zeros((1, 1), jnp.float32),
                                 unroll=(n_chunks <= 8))

    out_ref[...] += tile_sum          # (1,1) broadcast into the (8,128) block


def js_divergence(p, q, *, tile_rows=None, chunk_rows=None,
                  vmem_limit_bytes=None):
    """Pallas TPU implementation of Divergence.forward for 2-D (B, D) inputs.

    bf16 inputs are accepted (and preferred on bandwidth-bound parts like
    v5e); the kernel casts to f32 internally so the math stays f32.
    """
    assert p.shape == q.shape and p.ndim == 2, "kernel expects matching (B, D) inputs"
    B, D = p.shape

    isz_p = jnp.dtype(p.dtype).itemsize
    isz_q = jnp.dtype(q.dtype).itemsize
    itemsize = max(isz_p, isz_q)
    # dtype-aware sublane multiple: 8 rows f32, 16 bf16, 32 int8/fp8.
    sub = max(8, 32 // min(isz_p, isz_q))

    vmem_cap = _vmem_capacity_bytes()
    if vmem_limit_bytes is None:
        vmem_limit_bytes = int(0.55 * vmem_cap)
    else:
        vmem_limit_bytes = int(min(vmem_limit_bytes, 0.9 * vmem_cap))

    # Inner-chunk rows: bound the live f32 working set (~8 copies of (cr, D)
    # f32) independently of the DMA tile.
    if chunk_rows is not None:
        assert chunk_rows % sub == 0, f"chunk_rows must be a multiple of {sub}"
        cr = int(chunk_rows)
    else:
        cr = max(1, (512 * 1024) // (D * 4))
        cr = max(sub, (cr // sub) * sub)
        cr = min(cr, 2048)

    # DMA tile rows.
    if tile_rows is not None:
        assert tile_rows % sub == 0, (
            f"tile_rows must be a multiple of {sub} for dtype {p.dtype}")
        tb = int(tile_rows)
        cr = min(cr, tb)
        if tb % cr:
            cr = tb
    else:
        # Generation-aware per-input tile budget: ~6 MiB on 128 MiB VMEM parts
        # (v5e/v6e), ~3 MiB on 64 MiB parts (v7x).
        target = 6 * 2**20 if vmem_cap >= 96 * 2**20 else 3 * 2**20
        tb = cr * max(1, target // (cr * D * itemsize))
        b_min = ((B + sub - 1) // sub) * sub
        if b_min <= cr:
            cr = b_min
            tb = b_min
        elif b_min < tb:
            tb = ((b_min + cr - 1) // cr) * cr
        # Keep double-buffered inputs + chunk working set inside the limit.
        while tb > cr and (4 * tb * D * itemsize + 10 * cr * D * 4
                           ) > int(0.8 * vmem_limit_bytes):
            tb -= cr
    n_chunks = tb // cr

    # Grid: leading 2-way "parallel" axis (shards across v7x's two
    # TensorCores; harmless sequential outer loop on 1-TC chips).
    n_tiles = pl.cdiv(B, tb)
    n_par = 2 if n_tiles >= 2 else 1
    tiles_per_split = pl.cdiv(n_tiles, n_par)
    total_rows = n_par * tiles_per_split * tb
    pad = total_rows - B
    if pad:
        # Padded rows are explicitly masked out inside the kernel.
        p = jnp.pad(p, ((0, pad), (0, 0)))
        q = jnp.pad(q, ((0, pad), (0, 0)))
    mask_tail = pad > 0

    kernel = functools.partial(
        _js_div_kernel, chunk_rows=cr, n_chunks=n_chunks, tile_rows=tb,
        tiles_per_split=tiles_per_split, valid_rows=B, mask_tail=mask_tail)

    cost = pl.CostEstimate(
        flops=10 * B * D,
        transcendentals=3 * B * D,
        bytes_accessed=(isz_p + isz_q) * B * D + n_par * 8 * 128 * 4,
    )

    # One lane-dense (8,128) accumulator block per parallel slot; every
    # element of a block holds the same partial sum (unmasked full-vreg store).
    out = pl.pallas_call(
        kernel,
        out_shape=jax.ShapeDtypeStruct((n_par * 8, 128), jnp.float32),
        grid_spec=pltpu.PrefetchScalarGridSpec(
            num_scalar_prefetch=0,
            grid=(n_par, tiles_per_split),
            in_specs=[
                pl.BlockSpec((tb, D), lambda c, i: (c * tiles_per_split + i, 0)),
                pl.BlockSpec((tb, D), lambda c, i: (c * tiles_per_split + i, 0)),
            ],
            out_specs=pl.BlockSpec((8, 128), lambda c, i: (c, 0)),
        ),
        compiler_params=pltpu.CompilerParams(
            dimension_semantics=("parallel", "arbitrary"),
            vmem_limit_bytes=int(vmem_limit_bytes),
        ),
        cost_estimate=cost,
    )(p, q)

    partials = out[::8, 0]                              # one value per slot
    return jnp.sum(partials) * jnp.float32(0.5 / B)     # 0.5 * batchmean


def _js_divergence_ref(p, q):
    """Pure-JAX reference mirroring the PyTorch module."""
    p = jax.nn.softmax(p.astype(jnp.float32), axis=-1)
    q = jax.nn.softmax(q.astype(jnp.float32), axis=-1)
    m = jnp.maximum(0.5 * (p + q), EPS)
    b = p.shape[0]
    kl_p_m = jnp.sum(m * (jnp.log(m) - jnp.log(p))) / b
    kl_q_m = jnp.sum(m * (jnp.log(m) - jnp.log(q))) / b
    return 0.5 * (kl_p_m + kl_q_m)


if __name__ == "__main__":
    # Config 1: f32, two tiles -> exercises the 2-way parallel grid axis,
    # per-slot accumulator blocks and the wrapper-side sum + scale.
    B1, D1 = 16, 256
    kp1, kq1 = jax.random.split(jax.random.PRNGKey(0))
    p1 = jax.random.normal(kp1, (B1, D1), dtype=jnp.float32)
    q1 = jax.random.normal(kq1, (B1, D1), dtype=jnp.float32)
    out1 = jax.block_until_ready(js_divergence(p1, q1, tile_rows=8))
    ref1 = jax.block_until_ready(_js_divergence_ref(p1, q1))
    assert jnp.allclose(out1, ref1, rtol=1e-5, atol=1e-6), (out1, ref1)

    # Config 2: bf16 inputs, ragged batch (B=12, 16-row bf16-aligned tile)
    # -> exercises the masked padded-tail path and in-kernel f32 cast.
    B2, D2 = 12, 128
    kp2, kq2 = jax.random.split(jax.random.PRNGKey(1))
    p2 = jax.random.normal(kp2, (B2, D2), dtype=jnp.float32).astype(jnp.bfloat16)
    q2 = jax.random.normal(kq2, (B2, D2), dtype=jnp.float32).astype(jnp.bfloat16)
    out2 = jax.block_until_ready(js_divergence(p2, q2, tile_rows=16))
    ref2 = jax.block_until_ready(_js_divergence_ref(p2, q2))
    assert jnp.allclose(out2, ref2, rtol=1e-4, atol=1e-6), (out2, ref2)

    # Config 3: tile 32 rows split into 8-row sub-chunks -> exercises the
    # inner lax.fori_loop chunking plus the 2-way parallel split.
    B3, D3 = 64, 128
    kp3, kq3 = jax.random.split(jax.random.PRNGKey(2))
    p3 = jax.random.normal(kp3, (B3, D3), dtype=jnp.float32)
    q3 = jax.random.normal(kq3, (B3, D3), dtype=jnp.float32)
    out3 = jax.block_until_ready(js_divergence(p3, q3, tile_rows=32, chunk_rows=8))
    ref3 = jax.block_until_ready(_js_divergence_ref(p3, q3))
    assert jnp.allclose(out3, ref3, rtol=1e-5, atol=1e-6), (out3, ref3)

    # Config 4: fully auto-planned tiling (non-128-multiple D).
    B4, D4 = 24, 96
    kp4, kq4 = jax.random.split(jax.random.PRNGKey(3))
    p4 = jax.random.normal(kp4, (B4, D4), dtype=jnp.float32)
    q4 = jax.random.normal(kq4, (B4, D4), dtype=jnp.float32)
    out4 = jax.block_until_ready(js_divergence(p4, q4))
    ref4 = jax.block_until_ready(_js_divergence_ref(p4, q4))
    assert jnp.allclose(out4, ref4, rtol=1e-5, atol=1e-6), (out4, ref4)

    print("KERNEL_OK")
</pallas_src>

<mosaic_0001>
module attributes {stable_mosaic.version = 11 : i64} {
  func.func @_js_div_kernel(%arg0: i32, %arg1: i32, %arg2: memref<8x256xf32, #tpu.memory_space<vmem>>, %arg3: memref<8x256xf32, #tpu.memory_space<vmem>>, %arg4: memref<8x128xf32, #tpu.memory_space<vmem>>) attributes {dimension_semantics = [#tpu.dimension_semantics<parallel>, #tpu.dimension_semantics<arbitrary>], iteration_bounds = array<i64: 2, 1>, scalar_prefetch = 0 : i64, scratch_operands = 0 : i64, tpu.core_type = #tpu.core_type<tc>, window_params = [{transform_indices = @transform_0, window_bounds = array<i64: 8, 256>}, {transform_indices = @transform_1, window_bounds = array<i64: 8, 256>}, {transform_indices = @transform_2, window_bounds = array<i64: 8, 128>}]} {
    %c0_i32 = arith.constant 0 : i32
    %0 = arith.cmpi eq, %arg1, %c0_i32 : i32
    %1 = arith.extui %0 : i1 to i32
    %c0_i32_0 = arith.constant 0 : i32
    %2 = arith.cmpi ne, %1, %c0_i32_0 : i32
    scf.if %2 {
      %cst_16 = arith.constant 0.000000e+00 : f32
      %50 = vector.broadcast %cst_16 : f32 to vector<8x128xf32>
      %c0_17 = arith.constant 0 : index
      %c0_18 = arith.constant 0 : index
      %51 = vector.load %arg4[%c0_17, %c0_18] : memref<8x128xf32, #tpu.memory_space<vmem>>, vector<8x128xf32>
      tpu.vector_store %arg4[%c0_17, %c0_18], %50 {strides = array<i32>} : memref<8x128xf32, #tpu.memory_space<vmem>>, vector<8x128xf32>,
    } else {
    }
    %c0 = arith.constant 0 : index
    %c0_1 = arith.constant 0 : index
    %3 = vector.load %arg2[%c0, %c0_1] : memref<8x256xf32, #tpu.memory_space<vmem>>, vector<8x256xf32>
    %c0_2 = arith.constant 0 : index
    %c0_3 = arith.constant 0 : index
    %4 = vector.load %arg3[%c0_2, %c0_3] : memref<8x256xf32, #tpu.memory_space<vmem>>, vector<8x256xf32>
    %cst = arith.constant dense<0xFF800000> : vector<8xf32>
    %5 = vector.multi_reduction <maximumf>, %3, %cst [1] : vector<8x256xf32> to vector<8xf32>
    %6 = vector.shape_cast %5 : vector<8xf32> to vector<8x1xf32>
    %7 = vector.broadcast %6 : vector<8x1xf32> to vector<8x256xf32>
    %8 = arith.subf %3, %7 : vector<8x256xf32>
    %9 = math.exp %8 : vector<8x256xf32>
    %cst_4 = arith.constant dense<0.000000e+00> : vector<8xf32>
    %10 = vector.multi_reduction <add>, %9, %cst_4 [1] : vector<8x256xf32> to vector<8xf32>
    %11 = vector.shape_cast %10 : vector<8xf32> to vector<8x1xf32>
    %12 = math.log %11 : vector<8x1xf32>
    %13 = vector.broadcast %12 : vector<8x1xf32> to vector<8x256xf32>
    %14 = arith.subf %8, %13 : vector<8x256xf32>
    %15 = tpu.reciprocal %11 : vector<8x1xf32> -> vector<8x1xf32>
    %16 = vector.broadcast %15 : vector<8x1xf32> to vector<8x256xf32>
    %17 = arith.mulf %9, %16 : vector<8x256xf32>
    %cst_5 = arith.constant dense<0xFF800000> : vector<8xf32>
    %18 = vector.multi_reduction <maximumf>, %4, %cst_5 [1] : vector<8x256xf32> to vector<8xf32>
    %19 = vector.shape_cast %18 : vector<8xf32> to vector<8x1xf32>
    %20 = vector.broadcast %19 : vector<8x1xf32> to vector<8x256xf32>
    %21 = arith.subf %4, %20 : vector<8x256xf32>
    %22 = math.exp %21 : vector<8x256xf32>
    %cst_6 = arith.constant dense<0.000000e+00> : vector<8xf32>
    %23 = vector.multi_reduction <add>, %22, %cst_6 [1] : vector<8x256xf32> to vector<8xf32>
    %24 = vector.shape_cast %23 : vector<8xf32> to vector<8x1xf32>
    %25 = math.log %24 : vector<8x1xf32>
    %26 = vector.broadcast %25 : vector<8x1xf32> to vector<8x256xf32>
    %27 = arith.subf %21, %26 : vector<8x256xf32>
    %28 = tpu.reciprocal %24 : vector<8x1xf32> -> vector<8x1xf32>
    %29 = vector.broadcast %28 : vector<8x1xf32> to vector<8x256xf32>
    %30 = arith.mulf %22, %29 : vector<8x256xf32>
    %31 = arith.addf %17, %30 : vector<8x256xf32>
    %cst_7 = arith.constant 5.000000e-01 : f32
    %32 = vector.broadcast %cst_7 : f32 to vector<8x256xf32>
    %33 = arith.mulf %32, %31 : vector<8x256xf32>
    %cst_8 = arith.constant 1.000000e-07 : f32
    %34 = vector.broadcast %cst_8 : f32 to vector<8x256xf32>
    %35 = arith.maximumf %33, %34 : vector<8x256xf32>
    %36 = math.log %35 : vector<8x256xf32>
    %cst_9 = arith.constant 2.000000e+00 : f32
    %37 = vector.broadcast %cst_9 : f32 to vector<8x256xf32>
    %38 = arith.mulf %37, %36 : vector<8x256xf32>
    %39 = arith.subf %38, %14 : vector<8x256xf32>
    %40 = arith.subf %39, %27 : vector<8x256xf32>
    %41 = arith.mulf %35, %40 : vector<8x256xf32>
    %cst_10 = arith.constant dense<0.000000e+00> : vector<8xf32>
    %42 = vector.multi_reduction <add>, %41, %cst_10 [1] : vector<8x256xf32> to vector<8xf32>
    %43 = vector.shape_cast %42 : vector<8xf32> to vector<8x1xf32>
    %cst_11 = arith.constant dense<0.000000e+00> : vector<1xf32>
    %44 = vector.multi_reduction <add>, %43, %cst_11 [0] : vector<8x1xf32> to vector<1xf32>
    %45 = vector.shape_cast %44 : vector<1xf32> to vector<1x1xf32>
    %c0_12 = arith.constant 0 : index
    %c0_13 = arith.constant 0 : index
    %46 = vector.load %arg4[%c0_12, %c0_13] : memref<8x128xf32, #tpu.memory_space<vmem>>, vector<8x128xf32>
    %47 = vector.broadcast %45 : vector<1x1xf32> to vector<8x128xf32>
    %48 = arith.addf %46, %47 : vector<8x128xf32>
    %c0_14 = arith.constant 0 : index
    %c0_15 = arith.constant 0 : index
    %49 = vector.load %arg4[%c0_14, %c0_15] : memref<8x128xf32, #tpu.memory_space<vmem>>, vector<8x128xf32>
    tpu.vector_store %arg4[%c0_14, %c0_15], %48 {strides = array<i32>} : memref<8x128xf32, #tpu.memory_space<vmem>>, vector<8x128xf32>,
    return
  }
  func.func @transform_0(%arg0: i32, %arg1: i32) -> (i32, i32) {
    %c1_i32 = arith.constant 1 : i32
    %0 = arith.muli %arg0, %c1_i32 : i32
    %1 = arith.addi %0, %arg1 : i32
    %c0_i32 = arith.constant 0 : i32
    %c0_i32_0 = arith.constant 0 : i32
    return %1, %c0_i32 : i32, i32
  }
  func.func @transform_1(%arg0: i32, %arg1: i32) -> (i32, i32) {
    %c1_i32 = arith.constant 1 : i32
    %0 = arith.muli %arg0, %c1_i32 : i32
    %1 = arith.addi %0, %arg1 : i32
    %c0_i32 = arith.constant 0 : i32
    %c0_i32_0 = arith.constant 0 : i32
    return %1, %c0_i32 : i32, i32
  }
  func.func @transform_2(%arg0: i32, %arg1: i32) -> (i32, i32) {
    %c0_i32 = arith.constant 0 : i32
    %c0_i32_0 = arith.constant 0 : i32
    return %arg0, %c0_i32 : i32, i32
  }
}

</mosaic_0001>

<llo_original>
// kernel: tpu_custom_call.1
$region0: #{tpu_custom_call.1}
  #allocation0 [shape = 'u32[]', space=smem, size = 0x4, offset = 0x4, fixed_abs, tag = 'smem constant byte address 0x4 - core index']
  #allocation1 [shape = 'u32[72,128]{1,0:T(1,128)}', space=vmem, size = 0x9000, scoped, tag = 'internal scratch']
  %s0 = inlined_call_operand.hbm [shape: f32[16,256], index: 0, kind: input, shape index: {}]
  %s1 = inlined_call_operand.hbm [shape: f32[16,256], index: 1, kind: input, shape index: {}]
  %s2 = inlined_call_operand.hbm [shape: f32[16,128], index: 2, kind: output, shape index: {}]
  %s3 = sld [smem:[#allocation0]]
  $region53: #{tpu_custom_call.1} parent=0
    _
  %s5 = ssub.s32 1, %s3
  %s6 = scalar_select 0, %s5, %s3
  $region1: #{tpu_custom_call.1} parent=0
    #allocation2 [shape = 'u8[16384]{0}', space=vmem, size = 0x4000, scoped, tag = 'input window, operand 0']
    #allocation3 [shape = 's32[2]{0}', space=sflag, size = 0x8, scoped, tag = 'scoped memory for tpu_custom_call.1']
    #allocation4 [shape = 's32[2]{0}', space=sflag, size = 0x8, scoped, tag = 'scoped memory for tpu_custom_call.1']
    #allocation5 [shape = 'u8[16384]{0}', space=vmem, size = 0x4000, scoped, tag = 'input window, operand 1']
    #allocation6 [shape = 's32[2]{0}', space=sflag, size = 0x8, scoped, tag = 'scoped memory for tpu_custom_call.1']
    #allocation7 [shape = 'u8[8192]{0}', space=vmem, size = 0x2000, scoped, tag = 'output window, operand 0']
    %7 = vsyncpa [#allocation3], 0
    %s8 = scalar_lea.sflag [#allocation3], 1
    %9 = vsyncpa %s8, 0
    %10 = vsyncpa [#allocation6], 0
    %s11 = scalar_lea.sflag [#allocation6], 1
    %12 = vsyncpa %s11, 0
    %13 = vsyncpa [#allocation4], 0
    %s14 = scalar_lea.sflag [#allocation4], 1
    %15 = vsyncpa %s14, 0
    loop: start=0, step=1, limit=4
    $region2: #{tpu_custom_call.1} parent=1 // loop_pre_header
      _
    $region3: #{tpu_custom_call.1} parent=1 // loop_header
      %s17 = sphi 0, %s21
      %p18 = scmp.ge.s32.totalorder %s17, 4
      %s24 = sphi 0, %s36
      %s25 = sphi 0, %s32
      %s26 = sphi 0, %s24
      %s27 = sphi 0, %s25
      %s28 = sphi 0, %s26
      %s29 = sphi 0, %s27
      %s41 = sphi 0, %s43
      %s44 = sphi 0, %s41
      %s45 = sphi 0, %s44
      %s61 = sphi 0, %s45
      %s69 = sphi 0, %s71
      %s72 = sphi 0, %s69
      %s73 = sphi 0, %s72
      %s89 = sphi 0, %s73
      %s95 = sphi 0, %s97
      %s98 = sphi 0, %s95
      %s99 = sphi 0, %s98
      %s115 = sphi 0, %s99
    $region4: #{tpu_custom_call.1} parent=1 // loop_header_branch
      %20 = sbr.rel (%p18) target = $region8
    $region5: #{tpu_custom_call.1} parent=1 // loop_body
      %s22 = ssub.s32 %s17, 1
      %s23 = ssub.s32 %s17, 2
      %s30 = sadd.s32 1, %s25
      %p31 = scmp.ge.s32.totalorder %s30, 1
      %s32 = scalar_select %p31, 0, %s30
      %s33 = sadd.s32 1, %s24
      %s34 = scalar_select %p31, %s33, %s24
      %p35 = scmp.ge.s32.totalorder %s34, 2
      %s36 = scalar_select %p35, 0, %s34
      %s37 = sadd.s32 %s24, %s25
      %s38 = sadd.s32 %s36, %s32
      %s39 = ssub.s32 %s37, %s38
      %p40 = scmp.eq.s32.totalorder %s39, 0
      %s42 = sadd.s32 %s41, 1
      %s43 = scalar_select %p40, %s41, %s42
      %p46 = pneg %p40
      %p47 = scmp.eq.s32.totalorder %s17, 1
      %p48 = por %p46, %p47
      %p49 = scmp.ne.s32.totalorder %s41, %s44
      %p50 = scmp.eq.s32.totalorder %s17, 0
      %p51 = por %p49, %p50
      %p52 = scmp.ne.s32.totalorder %s41, %s44
      %p53 = scmp.eq.s32.totalorder %s22, 1
      %p54 = por %p52, %p53
      %p55 = scmp.ne.s32.totalorder %s44, %s45
      %p56 = scmp.eq.s32.totalorder %s22, 0
      %p57 = por %p55, %p56
      %p58 = scmp.ne.s32.totalorder %s44, %s45
      %p59 = scmp.eq.s32.totalorder %s23, 1
      %p60 = por %p58, %p59
      %p62 = scmp.ne.s32.totalorder %s45, %s61
      %p63 = scmp.eq.s32.totalorder %s23, 0
      %p64 = por %p62, %p63
      %s65 = sadd.s32 %s24, %s25
      %s66 = sadd.s32 %s36, %s32
      %s67 = ssub.s32 %s65, %s66
      %p68 = scmp.eq.s32.totalorder %s67, 0
      %s70 = sadd.s32 %s69, 1
      %s71 = scalar_select %p68, %s69, %s70
      %p74 = pneg %p68
      %p75 = scmp.eq.s32.totalorder %s17, 1
      %p76 = por %p74, %p75
      %p77 = scmp.ne.s32.totalorder %s69, %s72
      %p78 = scmp.eq.s32.totalorder %s17, 0
      %p79 = por %p77, %p78
      %p80 = scmp.ne.s32.totalorder %s69, %s72
      %p81 = scmp.eq.s32.totalorder %s22, 1
      %p82 = por %p80, %p81
      %p83 = scmp.ne.s32.totalorder %s72, %s73
      %p84 = scmp.eq.s32.totalorder %s22, 0
      %p85 = por %p83, %p84
      %p86 = scmp.ne.s32.totalorder %s72, %s73
      %p87 = scmp.eq.s32.totalorder %s23, 1
      %p88 = por %p86, %p87
      %p90 = scmp.ne.s32.totalorder %s73, %s89
      %p91 = scmp.eq.s32.totalorder %s23, 0
      %p92 = por %p90, %p91
      %s93 = ssub.s32 %s24, %s36
      %p94 = scmp.eq.s32.totalorder %s93, 0
      %s96 = sadd.s32 %s95, 1
      %s97 = scalar_select %p94, %s95, %s96
      %p100 = pneg %p94
      %p101 = scmp.eq.s32.totalorder %s17, 1
      %p102 = por %p100, %p101
      %p103 = scmp.ne.s32.totalorder %s95, %s98
      %p104 = scmp.eq.s32.totalorder %s17, 0
      %p105 = por %p103, %p104
      %p106 = scmp.ne.s32.totalorder %s95, %s98
      %p107 = scmp.eq.s32.totalorder %s22, 1
      %p108 = por %p106, %p107
      %p109 = scmp.ne.s32.totalorder %s98, %s99
      %p110 = scmp.eq.s32.totalorder %s22, 0
      %p111 = por %p109, %p110
      %p112 = scmp.ne.s32.totalorder %s98, %s99
      %p113 = scmp.eq.s32.totalorder %s23, 1
      %p114 = por %p112, %p113
      %p116 = scmp.ne.s32.totalorder %s99, %s115
      %p117 = scmp.eq.s32.totalorder %s23, 0
      %p118 = por %p116, %p117
      %p119 = scmp.le.s32.totalorder 1, %s17
      %p120 = scmp.lt.s32.totalorder %s17, 3
      %p121 = pnand %p119, %p120
      %p122 = pneg %p121
      // Predicated region
      $region9: #{tpu_custom_call.1} parent=5 // pred_check
        _
      $region10: #{tpu_custom_call.1} parent=5 // pred_check_branch
        %124 = sbr.rel (%p121) target = $region12
      $region11: #{tpu_custom_call.1} parent=5 // pred_region
        %s125 = ssub.s32 %s17, 1
      $region12: #{tpu_custom_call.1} parent=5 // pred_fallthru
        _
      %p126 = scmp.lt.s32.totalorder %s17, 2
      // Predicated region
      $region13: #{tpu_custom_call.1} parent=5 // pred_check
        %p127 = pneg %p126
      $region14: #{tpu_custom_call.1} parent=5 // pred_check_branch
        %129 = sbr.rel (%p127) target = $region16
      $region15: #{tpu_custom_call.1} parent=5 // pred_region
        // Predicated region
        $region17: #{tpu_custom_call.1} parent=15 // pred_check
          %p130 = pneg %p51
        $region18: #{tpu_custom_call.1} parent=15 // pred_check_branch
          %132 = sbr.rel (%p130) target = $region20
        $region19: #{tpu_custom_call.1} parent=15 // pred_region
          %s133 = sand.u32 %s41, 1
          %s134 = scalar_lea.sflag [#allocation3], %s133
          %s135 = sand.u32 %s41, 1
          %s136 = smul.addr %s135, 16
          %s137 = scalar_lea.vmem [#allocation2], %s136
          %s138 = sadd.s32 %s24, %s25
          %140 = vsyncadd %s134, 0
          %s141 = smul.addr %s138, 2
          %s142 = smul.addr %s141, 8
          %s143 = scalar_lea.hbm %s0, %s142
          %s145 = sshll.u32 %s143, 4
          %s146 = int_to_ptr.hbm [resolvable:$true] %s145
          %s147 = sshll.u32 %s137, 4
          %s148 = int_to_ptr.vmem [resolvable:$true] %s147
          %150 = dma.hbm_to_vmem [thread:$0]  %s146, 256, %s148, %s134
        $region20: #{tpu_custom_call.1} parent=15 // pred_fallthru
          _
        // Predicated region
        $region21: #{tpu_custom_call.1} parent=15 // pred_check
          %p151 = pneg %p79
        $region22: #{tpu_custom_call.1} parent=15 // pred_check_branch
          %153 = sbr.rel (%p151) target = $region24
        $region23: #{tpu_custom_call.1} parent=15 // pred_region
          %s154 = sand.u32 %s69, 1
          %s155 = scalar_lea.sflag [#allocation6], %s154
          %s156 = sand.u32 %s69, 1
          %s157 = smul.addr %s156, 16
          %s158 = scalar_lea.vmem [#allocation5], %s157
          %s159 = sadd.s32 %s24, %s25
          %161 = vsyncadd %s155, 0
          %s162 = smul.addr %s159, 2
          %s163 = smul.addr %s162, 8
          %s164 = scalar_lea.hbm %s1, %s163
          %s166 = sshll.u32 %s164, 4
          %s167 = int_to_ptr.hbm [resolvable:$true] %s166
          %s168 = sshll.u32 %s158, 4
          %s169 = int_to_ptr.vmem [resolvable:$true] %s168
          %171 = dma.hbm_to_vmem [thread:$0]  %s167, 256, %s169, %s155
        $region24: #{tpu_custom_call.1} parent=15 // pred_fallthru
          _
      $region16: #{tpu_custom_call.1} parent=5 // pred_fallthru
        _
      %p172 = scmp.le.s32.totalorder 1, %s17
      %p173 = scmp.lt.s32.totalorder %s17, 3
      %p174 = pnand %p172, %p173
      %p175 = pneg %p174
      // Predicated region
      $region25: #{tpu_custom_call.1} parent=5 // pred_check
        _
      $region26: #{tpu_custom_call.1} parent=5 // pred_check_branch
        %177 = sbr.rel (%p174) target = $region28
      $region27: #{tpu_custom_call.1} parent=5 // pred_region
        %s178 = ssub.s32 %s17, 1
        %s179 = sand.u32 %s44, 1
        %s180 = scalar_lea.sflag [#allocation3], %s179
        %s181 = sand.u32 %s44, 1
        %s182 = smul.addr %s181, 16
        %s183 = scalar_lea.vmem [#allocation2], %s182
        // Predicated region
        $region29: #{tpu_custom_call.1} parent=27 // pred_check
          %p184 = pneg %p57
        $region30: #{tpu_custom_call.1} parent=27 // pred_check_branch
          %186 = sbr.rel (%p184) target = $region32
        $region31: #{tpu_custom_call.1} parent=27 // pred_region
          %188 = dma.done %s180, 256
        $region32: #{tpu_custom_call.1} parent=27 // pred_fallthru
          _
        %s189 = sand.u32 %s72, 1
        %s190 = scalar_lea.sflag [#allocation6], %s189
        %s191 = sand.u32 %s72, 1
        %s192 = smul.addr %s191, 16
        %s193 = scalar_lea.vmem [#allocation5], %s192
        // Predicated region
        $region33: #{tpu_custom_call.1} parent=27 // pred_check
          %p194 = pneg %p85
        $region34: #{tpu_custom_call.1} parent=27 // pred_check_branch
          %196 = sbr.rel (%p194) target = $region36
        $region35: #{tpu_custom_call.1} parent=27 // pred_region
          %198 = dma.done %s190, 256
        $region36: #{tpu_custom_call.1} parent=27 // pred_fallthru
          _
        %s199 = sand.u32 %s44, 1
        %s200 = scalar_lea.sflag [#allocation3], %s199
        %s201 = sand.u32 %s44, 1
        %s202 = smul.addr %s201, 16
        %s203 = scalar_lea.vmem [#allocation2], %s202
        %p204 = pneg %p57
        %p205 = pneg %p54
        %s206 = sand.u32 %s72, 1
        %s207 = scalar_lea.sflag [#allocation6], %s206
        %s208 = sand.u32 %s72, 1
        %s209 = smul.addr %s208, 16
        %s210 = scalar_lea.vmem [#allocation5], %s209
        %p211 = pneg %p85
        %p212 = pneg %p82
        %p213 = pneg %p111
        %p214 = pneg %p108
        %s215 = sand.u32 %s98, 1
        %s216 = scalar_lea.sflag [#allocation4], %s215
        %s217 = sand.u32 %s98, 1
        %s218 = smul.addr %s217, 8
        %s219 = scalar_lea.vmem [#allocation7], %s218
        %s220 = sadd.s32 %s26, %s27
        %s221 = sadd.s32 %s26, %s27
        %p222 = scmp.eq.s32.totalorder %s27, 0
        // Predicated region
        $region37: #{tpu_custom_call.1} parent=27 // pred_check
          %p223 = pneg %p222
        $region38: #{tpu_custom_call.1} parent=27 // pred_check_branch
          %225 = sbr.rel (%p223) target = $region40
        $region39: #{tpu_custom_call.1} parent=27 // pred_region
          %226 = vst [vmem:[%s219] sm:$0xff] 0.0
        $region40: #{tpu_custom_call.1} parent=27 // pred_fallthru
          _
        %v227 = vld [vmem:[%s183] sm:$0xff]
        %v228 = vld [vmem:[%s183 + $0x8] sm:$0xff]
        %v229 = vld [vmem:[%s193] sm:$0xff]
        %v230 = vld [vmem:[%s193 + $0x8] sm:$0xff]
        %v231 = vmax.f32 %v227, %v228
        %232 = vmax.xlane.f32.xlu0 %v231
        %v233 = vpop.xlane.xlu0 %232
        %v234 = vsub.f32 %v227, %v233
        %v235 = vsub.f32 %v228, %v233
        %v236 = vmul.f32 %v234, 1.442695
        %v237 = vpow.pop %v236
        %v238 = vmul.f32 %v235, 1.442695
        %v239 = vpow.pop %v238
        %v240 = vadd.f32 %v237, %v239
        %241 = vadd.xlane.f32.xlu0 %v240
        %v242 = vpop.xlane.xlu0 %241
        %v243 = vlog2.pop %v242
        %v244 = vmul.f32 %v243, 0.6931472
        %v245 = vsub.f32 %v234, %v244
        %v246 = vsub.f32 %v235, %v244
        %v247 = vrcp.pop %v242
        %v248 = vmul.f32 %v242, %v247
        %v249 = vsub.f32 1.0, %v248
        %v250 = vmul.f32 %v247, %v249
        %v251 = vadd.f32 %v247, %v250
        %vm252 = vweird.f32 %v242
        %vm253 = vweird.f32 %v247
        %vm254 = vmor %vm252, %vm253
        %v255 = vsel %vm254, %v247, %v251
        %v256 = vand.u32 2147483647, %v242
        %vm257 = vcmp.eq.f32.partialorder %v256, 8.507059e+37
        %v258 = vand.u32 %v242, 2147483648
        %v259 = vor.u32 1.1754944e-38, %v258
        %v260 = vsel %vm257, %v259, %v255
        %v261 = vmul.f32 %v237, %v260
        %v262 = vmul.f32 %v239, %v260
        %v263 = vmax.f32 %v229, %v230
        %264 = vmax.xlane.f32.xlu0 %v263
        %v265 = vpop.xlane.xlu0 %264
        %v266 = vsub.f32 %v229, %v265
        %v267 = vsub.f32 %v230, %v265
        %v268 = vmul.f32 %v266, 1.442695
        %v269 = vpow.pop %v268
        %v270 = vmul.f32 %v267, 1.442695
        %v271 = vpow.pop %v270
        %v272 = vadd.f32 %v269, %v271
        %273 = vadd.xlane.f32.xlu0 %v272
        %v274 = vpop.xlane.xlu0 %273
        %v275 = vlog2.pop %v274
        %v276 = vmul.f32 %v275, 0.6931472
        %v277 = vsub.f32 %v266, %v276
        %v278 = vsub.f32 %v267, %v276
        %v279 = vrcp.pop %v274
        %v280 = vmul.f32 %v274, %v279
        %v281 = vsub.f32 1.0, %v280
        %v282 = vmul.f32 %v279, %v281
        %v283 = vadd.f32 %v279, %v282
        %vm284 = vweird.f32 %v274
        %vm285 = vweird.f32 %v279
        %vm286 = vmor %vm284, %vm285
        %v287 = vsel %vm286, %v279, %v283
        %v288 = vand.u32 2147483647, %v274
        %vm289 = vcmp.eq.f32.partialorder %v288, 8.507059e+37
        %v290 = vand.u32 %v274, 2147483648
        %v291 = vor.u32 1.1754944e-38, %v290
        %v292 = vsel %vm289, %v291, %v287
        %v293 = vmul.f32 %v269, %v292
        %v294 = vmul.f32 %v271, %v292
        %v295 = vadd.f32 %v261, %v293
        %v296 = vadd.f32 %v262, %v294
        %v297 = vmul.f32 %v295, 0.5
        %v298 = vmul.f32 %v296, 0.5
        %v299 = vmax.f32 %v297, 1e-07
        %v300 = vmax.f32 %v298, 1e-07
        %v301 = vlog2.pop %v299
        %v302 = vmul.f32 %v301, 0.6931472
        %v303 = vlog2.pop %v300
        %v304 = vmul.f32 %v303, 0.6931472
        %v305 = vmul.f32 %v302, 2.0
        %v306 = vmul.f32 %v304, 2.0
        %v307 = vsub.f32 %v305, %v245
        %v308 = vsub.f32 %v306, %v246
        %v309 = vsub.f32 %v307, %v277
        %v310 = vsub.f32 %v308, %v278
        %v311 = vmul.f32 %v299, %v309
        %v312 = vmul.f32 %v300, %v310
        %v313 = vadd.f32 %v311, %v312
        %314 = vadd.xlane.f32.xlu0 %v313
        %v315 = vpop.xlane.xlu0 %314
        %v316 = vrot.slane %v315, 4
        %v317 = vadd.f32 %v315, %v316
        %v318 = vrot.slane %v317, 2
        %v319 = vadd.f32 %v317, %v318
        %v320 = vrot.slane %v319, 1
        %v321 = vadd.f32 %v319, %v320
        %v322 = vld [vmem:[%s219] sm:$0xff]
        %v323 = vadd.f32 %v322, %v321
        %324 = vst [vmem:[%s219] sm:$0xff] %v323
        %s325 = sand.u32 %s98, 1
        %s326 = scalar_lea.sflag [#allocation4], %s325
        %s327 = sand.u32 %s98, 1
        %s328 = smul.addr %s327, 8
        %s329 = scalar_lea.vmem [#allocation7], %s328
        // Predicated region
        $region41: #{tpu_custom_call.1} parent=27 // pred_check
          %p330 = pneg %p108
        $region42: #{tpu_custom_call.1} parent=27 // pred_check_branch
          %332 = sbr.rel (%p330) target = $region44
        $region43: #{tpu_custom_call.1} parent=27 // pred_region
          %334 = vsyncadd %s326, 0
          %s335 = smul.addr %s26, 8
          %s336 = scalar_lea.hbm %s2, %s335
          %s338 = sshll.u32 %s329, 4
          %s339 = int_to_ptr.vmem [resolvable:$true] %s338
          %s340 = sshll.u32 %s336, 4
          %s341 = int_to_ptr.hbm [resolvable:$true] %s340
          %343 = dma.vmem_to_hbm [thread:$0]  %s339, 128, %s341, %s326
        $region44: #{tpu_custom_call.1} parent=27 // pred_fallthru
          _
      $region28: #{tpu_custom_call.1} parent=5 // pred_fallthru
        _
      %p344 = scmp.le.s32.totalorder 2, %s17
      // Predicated region
      $region45: #{tpu_custom_call.1} parent=5 // pred_check
        %p345 = pneg %p344
      $region46: #{tpu_custom_call.1} parent=5 // pred_check_branch
        %347 = sbr.rel (%p345) target = $region48
      $region47: #{tpu_custom_call.1} parent=5 // pred_region
        %s348 = ssub.s32 %s17, 2
        // Predicated region
        $region49: #{tpu_custom_call.1} parent=47 // pred_check
          %p349 = pneg %p114
        $region50: #{tpu_custom_call.1} parent=47 // pred_check_branch
          %351 = sbr.rel (%p349) target = $region52
        $region51: #{tpu_custom_call.1} parent=47 // pred_region
          %s352 = sand.u32 %s99, 1
          %s353 = scalar_lea.sflag [#allocation4], %s352
          %s354 = sand.u32 %s99, 1
          %s355 = smul.addr %s354, 8
          %s356 = scalar_lea.vmem [#allocation7], %s355
          %358 = dma.done %s353, 128
        $region52: #{tpu_custom_call.1} parent=47 // pred_fallthru
          _
      $region48: #{tpu_custom_call.1} parent=5 // pred_fallthru
        _
    $region6: #{tpu_custom_call.1} parent=1 // loop_footer
      %s21 = sadd.s32 1, %s17
    $region7: #{tpu_custom_call.1} parent=1 // loop_footer_branch
      %16 = sbr.rel target = $region3
    $region8: #{tpu_custom_call.1} parent=1 // loop_exit
      _
    %359 = vsyncpa [#allocation3], 1
    %s360 = scalar_lea.sflag [#allocation3], 1
    %361 = vsyncpa %s360, 1
    %362 = vsyncpa [#allocation6], 1
    %s363 = scalar_lea.sflag [#allocation6], 1
    %364 = vsyncpa %s363, 1
    %365 = vsyncpa [#allocation4], 1
    %s366 = scalar_lea.sflag [#allocation4], 1
    %367 = vsyncpa %s366, 1

</llo_original>
